<compile_context>
chip_gen: v7x
topology: tpu7x:2x2x1
jax: 0.10.0
libtpu: 0.0.40
codegen_flags: <defaults>
</compile_context>

<pallas_src>
import math

import jax
import jax.numpy as jnp
from jax.experimental import pallas as pl
from jax.experimental.pallas import tpu as pltpu


_VMEM = pl.BlockSpec(memory_space=pltpu.MemorySpace.VMEM)
_SMEM = pl.BlockSpec(memory_space=pltpu.MemorySpace.SMEM)


# ----------------------------------------------------------------------------
# Shared in-kernel math helpers
# ----------------------------------------------------------------------------
def _sigmoid(x):
    return 1.0 / (1.0 + jnp.exp(-x))


def _lstm_update(gates, c_prev, H):
    """gates: [B, 4H] (PyTorch order i, f, g, o); returns (h_new, c_new)."""
    i = _sigmoid(gates[:, 0:H])
    f = _sigmoid(gates[:, H:2 * H])
    g = jnp.tanh(gates[:, 2 * H:3 * H])
    o = _sigmoid(gates[:, 3 * H:4 * H])
    c_new = f * c_prev + i * g
    h_new = o * jnp.tanh(c_new)
    return h_new, c_new


def _attention_math(h0, feats, wh, bh, wf, bf, w2):
    """h0: [B,H], feats: [n,B,S,H] -> (ctx_all [n,B,H], w_all [n,B,S])."""
    n, B, S, H = feats.shape
    M = wh.shape[1]
    # hidden projection computed once, shared across feature streams.
    h_proj = jnp.dot(h0, wh, preferred_element_type=jnp.float32) + bh    # [B,M]
    # feature projection for ALL streams as one MXU matmul.
    f_proj = (jnp.dot(feats.reshape(n * B * S, H), wf,
                      preferred_element_type=jnp.float32) + bf)
    f_proj = f_proj.reshape(n, B, S, M)
    # fusion_type='addition', activation_type='acc' -> tanh after the sum.
    e = jnp.tanh(h_proj[None, :, None, :] + f_proj)                      # [n,B,S,M]
    # linear2_temporal ([M -> 1], no bias): keep on VPU/XLU (1-lane matmul is
    # the worst MXU output layout).
    score = jnp.sum(e * w2.reshape(1, 1, 1, M), axis=-1)                 # [n,B,S]
    # Softmax over S; reciprocal on the EUP + one Newton step (denom >= 1).
    m = jnp.max(score, axis=-1, keepdims=True)
    p = jnp.exp(score - m)
    denom = jnp.sum(p, axis=-1, keepdims=True)
    inv = pl.reciprocal(denom, approx=True)
    inv = inv * (2.0 - denom * inv)
    w_all = p * inv                                                      # [n,B,S]
    # Attended context on VPU + XLU sublane reduce (S is tiny -> a q=1 MXU bmm
    # would be push/pop latency dominated).
    ctx_all = jnp.sum(w_all[:, :, :, None] * feats, axis=2)              # [n,B,H]
    return ctx_all, w_all


# ----------------------------------------------------------------------------
# Standalone Attentional_Attention kernel
# ----------------------------------------------------------------------------
def _attention_kernel(hidden_ref, feats_ref, wh_ref, bh_ref, wf_ref, bf_ref,
                      w2_ref, ctx_ref, weight_ref):
    n, B, S, H = feats_ref.shape
    ctx_all, w_all = _attention_math(hidden_ref[...], feats_ref[...],
                                     wh_ref[...], bh_ref[...],
                                     wf_ref[...], bf_ref[...], w2_ref[...])
    # Direct static-slice stores in the torch.cat(dim=1) layout.
    for f in range(n):
        ctx_ref[:, f * H:(f + 1) * H] = ctx_all[f]
        weight_ref[:, f * S:(f + 1) * S] = w_all[f]


def attentional_attention(hidden_state, feats, att_params):
    """hidden_state: [B,H]; feats: [n,B,S,H] (or list of [B,S,H])."""
    if isinstance(feats, (list, tuple)):
        feats = jnp.stack(feats, axis=0)
    w_h, b_h, w_f, b_f, w_2 = att_params
    n, B, S, H = feats.shape
    ctx, weight = pl.pallas_call(
        _attention_kernel,
        out_shape=(
            jax.ShapeDtypeStruct((B, n * H), jnp.float32),
            jax.ShapeDtypeStruct((B, n * S), jnp.float32),
        ),
        in_specs=[_VMEM] * 7,
        out_specs=(_VMEM, _VMEM),
    )(hidden_state, feats, w_h, b_h, w_f, b_f, w_2)
    return ctx, weight


# ----------------------------------------------------------------------------
# Fully-fused LSTM_Decoder2 step kernel
#   embedding gather -> LSTMCell #1 -> attention -> LSTMCell #2
# ----------------------------------------------------------------------------
def _decoder_step_kernel(it_ref,                         # SMEM [B] int32
                         emb_ref, feats_ref,             # [V,H], [n,B,S,H]
                         h0p_ref, c0p_ref, h1p_ref, c1p_ref,   # [B,H] each
                         wih1_ref, whh1_ref, b1_ref,     # [H,4H],[H,4H],[1,4H]
                         wh_ref, bh_ref, wf_ref, bf_ref, w2_ref,  # attention
                         wih2_ref, whh2_ref, b2_ref,     # [(1+n)H,4H],[H,4H],[1,4H]
                         h0_ref, c0_ref, h1_ref, c1_ref, weight_ref):
    n, B, S, H = feats_ref.shape

    # (0) Embedding gather: token ids from SMEM drive dynamic VMEM row slices.
    rows = [emb_ref[pl.ds(it_ref[b], 1), :] for b in range(B)]
    x = jnp.concatenate(rows, axis=0)                             # [B, H]

    # (1) LSTM cell #1 (dropout = identity in eval).
    gates1 = (jnp.dot(x, wih1_ref[...], preferred_element_type=jnp.float32)
              + jnp.dot(h0p_ref[...], whh1_ref[...],
                        preferred_element_type=jnp.float32)
              + b1_ref[...])                                      # [B, 4H]
    h0, c0 = _lstm_update(gates1, c0p_ref[...], H)

    # (2) Attentional_Attention on the fresh hidden state (all in VMEM).
    ctx_all, w_all = _attention_math(h0, feats_ref[...],
                                     wh_ref[...], bh_ref[...],
                                     wf_ref[...], bf_ref[...], w2_ref[...])

    # (3) LSTM cell #2 on cat([h0, context], dim=1) WITHOUT a concat:
    #     partial matmuls against static slices of wih2 accumulate in f32.
    wih2 = wih2_ref[...]
    gates2 = (jnp.dot(h0, wih2[0:H, :], preferred_element_type=jnp.float32)
              + jnp.dot(h1p_ref[...], whh2_ref[...],
                        preferred_element_type=jnp.float32)
              + b2_ref[...])                                      # [B, 4H]
    for f in range(n):                                            # static unroll
        gates2 = gates2 + jnp.dot(ctx_all[f],
                                  wih2[H + f * H:H + (f + 1) * H, :],
                                  preferred_element_type=jnp.float32)
    h1, c1 = _lstm_update(gates2, c1p_ref[...], H)

    # (4) Outputs (dropout = identity in eval).
    h0_ref[...] = h0
    c0_ref[...] = c0
    h1_ref[...] = h1
    c1_ref[...] = c1
    for f in range(n):
        weight_ref[:, f * S:(f + 1) * S] = w_all[f]


def lstm_decoder2_forward(it, encoder_outputs, decoder_hidden, params):
    """Single fused decoder step (with_category=False, eval-mode dropout)."""
    emb, rnn1_p, rnn2_p, att_params = params
    feats = (jnp.stack(encoder_outputs, axis=0)
             if isinstance(encoder_outputs, (list, tuple)) else encoder_outputs)
    n, B, S, H = feats.shape
    (h0p, c0p), (h1p, c1p) = decoder_hidden
    wih1, whh1, b1 = rnn1_p
    wih2, whh2, b2 = rnn2_p
    w_h, b_h, w_f, b_f, w_2 = att_params

    out_shape = (
        jax.ShapeDtypeStruct((B, H), jnp.float32),        # h0
        jax.ShapeDtypeStruct((B, H), jnp.float32),        # c0
        jax.ShapeDtypeStruct((B, H), jnp.float32),        # h1
        jax.ShapeDtypeStruct((B, H), jnp.float32),        # c1
        jax.ShapeDtypeStruct((B, n * S), jnp.float32),    # frames_weight
    )
    h0, c0, h1, c1, frames_weight = pl.pallas_call(
        _decoder_step_kernel,
        out_shape=out_shape,
        in_specs=[_SMEM] + [_VMEM] * 17,
        out_specs=(_VMEM,) * 5,
    )(it, emb, feats, h0p, c0p, h1p, c1p,
      wih1, whh1, b1, w_h, b_h, w_f, b_f, w_2, wih2, whh2, b2)

    # TODO(synk): source calls `self.rnn` for the second cell, which is
    #             shape-incompatible with [hidden, context]; we use `self.rnn2`
    #             per the constructor intent (documented deviation).
    return h1, [(h0, c0), (h1, c1)], frames_weight


# ----------------------------------------------------------------------------
# Pure-JAX references
# ----------------------------------------------------------------------------
def _attention_ref(hidden_state, feats, att_params):
    w_h, b_h, w_f, b_f, w_2 = att_params
    n, B, S, H = feats.shape
    h_proj = hidden_state @ w_h + b_h
    ctxs, ws = [], []
    for i in range(n):
        feat = feats[i]
        f_proj = feat.reshape(B * S, H) @ w_f + b_f
        e = jnp.tanh(h_proj[:, None, :] + f_proj.reshape(B, S, -1))
        score = jnp.sum(e * w_2[None, :, :], axis=-1)
        w = jax.nn.softmax(score, axis=1)
        ws.append(w)
        ctxs.append(jnp.einsum('bs,bsh->bh', w, feat))
    return jnp.concatenate(ctxs, axis=1), jnp.concatenate(ws, axis=1)


def _lstm_cell_ref(x, h, c, wih, whh, b):
    H = h.shape[1]
    g = x @ wih + h @ whh + b
    i = jax.nn.sigmoid(g[:, 0:H])
    f = jax.nn.sigmoid(g[:, H:2 * H])
    gg = jnp.tanh(g[:, 2 * H:3 * H])
    o = jax.nn.sigmoid(g[:, 3 * H:4 * H])
    c_new = f * c + i * gg
    return o * jnp.tanh(c_new), c_new


def _decoder_ref(it, encoder_outputs, decoder_hidden, params):
    emb, r1, r2, attp = params
    x = emb[it]
    h0, c0 = _lstm_cell_ref(x, decoder_hidden[0][0], decoder_hidden[0][1], *r1)
    ctx, fw = _attention_ref(h0, encoder_outputs, attp)
    x2 = jnp.concatenate([h0, ctx], axis=1)
    h1, c1 = _lstm_cell_ref(x2, decoder_hidden[1][0], decoder_hidden[1][1], *r2)
    return h1, [(h0, c0), (h1, c1)], fw


# ----------------------------------------------------------------------------
# Parameter construction helpers
# ----------------------------------------------------------------------------
def _xavier(key, torch_shape):
    fan_out, fan_in = torch_shape                 # torch Linear weight [out, in]
    std = math.sqrt(2.0 / (fan_in + fan_out))
    return std * jax.random.normal(key, torch_shape, dtype=jnp.float32)


def _lstm_params(key, input_size, hidden_size, forget_bias):
    k1, k2, k3, k4 = jax.random.split(key, 4)
    bound = 1.0 / math.sqrt(hidden_size)
    wih = jax.random.uniform(k1, (input_size, 4 * hidden_size),
                             minval=-bound, maxval=bound, dtype=jnp.float32)
    whh = jax.random.uniform(k2, (hidden_size, 4 * hidden_size),
                             minval=-bound, maxval=bound, dtype=jnp.float32)
    b_ih = jax.random.uniform(k3, (4 * hidden_size,),
                              minval=-bound, maxval=bound, dtype=jnp.float32)
    b_hh = jax.random.uniform(k4, (4 * hidden_size,),
                              minval=-bound, maxval=bound, dtype=jnp.float32)
    b = b_ih + b_hh
    # _init_lstm_forget_bias: +forget_bias/2 on each bias -> +forget_bias combined.
    b = b.at[hidden_size:2 * hidden_size].add(forget_bias)
    return wih, whh, b.reshape(1, 4 * hidden_size)


if __name__ == "__main__":
    B, S, H, M, V = 2, 8, 32, 32, 50          # dim_hidden=32, att_mid=32, seq=8
    FORGET_BIAS = 0.6

    key = jax.random.PRNGKey(0)
    ks = jax.random.split(key, 13)

    # Attentional_Attention parameters (linear weights stored as [in, out]).
    w_h = _xavier(ks[0], (M, H)).T                # [H, M]
    w_f = _xavier(ks[1], (M, H)).T                # [H, M]
    w_2 = _xavier(ks[2], (1, M))                  # [1, M]  (no bias)
    bound = 1.0 / math.sqrt(H)
    b_h = jax.random.uniform(ks[3], (1, M), minval=-bound, maxval=bound,
                             dtype=jnp.float32)
    b_f = jax.random.uniform(ks[4], (1, M), minval=-bound, maxval=bound,
                             dtype=jnp.float32)
    att_params = (w_h, b_h, w_f, b_f, w_2)

    # LSTM cells + embedding (rnn1 input = word_size=H; rnn2 input = H + feats=2H).
    rnn1_p = _lstm_params(ks[5], H, H, FORGET_BIAS)
    rnn2_p = _lstm_params(ks[6], 2 * H, H, FORGET_BIAS)
    emb = jax.random.normal(ks[7], (V, H), dtype=jnp.float32)

    # Inputs.
    it = jax.random.randint(ks[8], (B,), 0, V).astype(jnp.int32)
    encoder_outputs = jax.random.normal(ks[9], (1, B, S, H), dtype=jnp.float32)
    encoder_hidden = jax.random.normal(ks[10], (B, H), dtype=jnp.float32)
    decoder_hidden = [(encoder_hidden, encoder_hidden),
                      (encoder_hidden, encoder_hidden)]
    feats2 = jax.random.normal(ks[11], (2, B, S, H), dtype=jnp.float32)

    # ---- 1) standalone attention kernel check (num_feats = 2) ----
    att_ctx, att_w = jax.jit(attentional_attention)(encoder_hidden, feats2,
                                                    att_params)
    jax.block_until_ready((att_ctx, att_w))
    ref_ctx, ref_w = _attention_ref(encoder_hidden, feats2, att_params)
    assert att_ctx.shape == (B, 2 * H) and att_w.shape == (B, 2 * S)
    assert jnp.allclose(att_ctx, ref_ctx, atol=1e-3, rtol=1e-3)
    assert jnp.allclose(att_w, ref_w, atol=1e-3, rtol=1e-3)

    # ---- 2) full fused LSTM_Decoder2 forward (num_feats = 1) ----
    params = (emb, rnn1_p, rnn2_p, att_params)
    out, new_hidden, frames_weight = jax.jit(lstm_decoder2_forward)(
        it, encoder_outputs, decoder_hidden, params)
    jax.block_until_ready((out, new_hidden, frames_weight))
    ref_out, ref_hidden, ref_fw = _decoder_ref(it, encoder_outputs,
                                               decoder_hidden, params)
    assert out.shape == (B, H) and frames_weight.shape == (B, S)
    assert jnp.allclose(new_hidden[0][0], ref_hidden[0][0], atol=1e-4, rtol=1e-4)
    assert jnp.allclose(new_hidden[0][1], ref_hidden[0][1], atol=1e-4, rtol=1e-4)
    assert jnp.allclose(new_hidden[1][0], ref_hidden[1][0], atol=1e-3, rtol=1e-3)
    assert jnp.allclose(new_hidden[1][1], ref_hidden[1][1], atol=1e-3, rtol=1e-3)
    assert jnp.allclose(frames_weight, ref_fw, atol=1e-3, rtol=1e-3)
    assert jnp.allclose(out, ref_out, atol=1e-3, rtol=1e-3)

    print("KERNEL_OK")
</pallas_src>

<mosaic_0001>
module attributes {stable_mosaic.version = 11 : i64} {
  func.func @_attention_kernel(%arg0: memref<2x32xf32, #tpu.memory_space<vmem>>, %arg1: memref<2x2x8x32xf32, #tpu.memory_space<vmem>>, %arg2: memref<32x32xf32, #tpu.memory_space<vmem>>, %arg3: memref<1x32xf32, #tpu.memory_space<vmem>>, %arg4: memref<32x32xf32, #tpu.memory_space<vmem>>, %arg5: memref<1x32xf32, #tpu.memory_space<vmem>>, %arg6: memref<1x32xf32, #tpu.memory_space<vmem>>, %arg7: memref<2x64xf32, #tpu.memory_space<vmem>>, %arg8: memref<2x16xf32, #tpu.memory_space<vmem>>) attributes {dimension_semantics = [], scalar_prefetch = 0 : i64, scratch_operands = 0 : i64, tpu.core_type = #tpu.core_type<tc>} {
    %c0 = arith.constant 0 : index
    %c0_0 = arith.constant 0 : index
    %0 = vector.load %arg0[%c0, %c0_0] : memref<2x32xf32, #tpu.memory_space<vmem>>, vector<2x32xf32>
    %c0_1 = arith.constant 0 : index
    %c0_2 = arith.constant 0 : index
    %c0_3 = arith.constant 0 : index
    %c0_4 = arith.constant 0 : index
    %1 = vector.load %arg1[%c0_1, %c0_2, %c0_3, %c0_4] : memref<2x2x8x32xf32, #tpu.memory_space<vmem>>, vector<2x2x8x32xf32>
    %c0_5 = arith.constant 0 : index
    %c0_6 = arith.constant 0 : index
    %2 = vector.load %arg2[%c0_5, %c0_6] : memref<32x32xf32, #tpu.memory_space<vmem>>, vector<32x32xf32>
    %c0_7 = arith.constant 0 : index
    %c0_8 = arith.constant 0 : index
    %3 = vector.load %arg3[%c0_7, %c0_8] : memref<1x32xf32, #tpu.memory_space<vmem>>, vector<1x32xf32>
    %c0_9 = arith.constant 0 : index
    %c0_10 = arith.constant 0 : index
    %4 = vector.load %arg4[%c0_9, %c0_10] : memref<32x32xf32, #tpu.memory_space<vmem>>, vector<32x32xf32>
    %c0_11 = arith.constant 0 : index
    %c0_12 = arith.constant 0 : index
    %5 = vector.load %arg5[%c0_11, %c0_12] : memref<1x32xf32, #tpu.memory_space<vmem>>, vector<1x32xf32>
    %c0_13 = arith.constant 0 : index
    %c0_14 = arith.constant 0 : index
    %6 = vector.load %arg6[%c0_13, %c0_14] : memref<1x32xf32, #tpu.memory_space<vmem>>, vector<1x32xf32>
    %cst = arith.constant dense<0.000000e+00> : vector<2x32xf32>
    %7 = tpu.matmul %0, %2, %cst {dimension_numbers = #tpu.dot_dimension_numbers<[1], [0], [0], [1], [0, 0, 1, 1], [], []>} : vector<2x32xf32>, vector<32x32xf32>, vector<2x32xf32> -> vector<2x32xf32>
    %8 = vector.broadcast %3 : vector<1x32xf32> to vector<2x32xf32>
    %9 = arith.addf %7, %8 : vector<2x32xf32>
    %10 = vector.shape_cast %1 : vector<2x2x8x32xf32> to vector<32x32xf32>
    %cst_15 = arith.constant dense<0.000000e+00> : vector<32x32xf32>
    %11 = tpu.matmul %10, %4, %cst_15 {dimension_numbers = #tpu.dot_dimension_numbers<[1], [0], [0], [1], [0, 0, 1, 1], [], []>} : vector<32x32xf32>, vector<32x32xf32>, vector<32x32xf32> -> vector<32x32xf32>
    %12 = vector.broadcast %5 : vector<1x32xf32> to vector<32x32xf32>
    %13 = arith.addf %11, %12 : vector<32x32xf32>
    %14 = vector.shape_cast %13 : vector<32x32xf32> to vector<2x2x8x32xf32>
    %15 = vector.shape_cast %9 : vector<2x32xf32> to vector<1x2x1x32xf32>
    %16 = vector.broadcast %15 : vector<1x2x1x32xf32> to vector<2x2x8x32xf32>
    %17 = arith.addf %16, %14 : vector<2x2x8x32xf32>
    %18 = math.tanh %17 : vector<2x2x8x32xf32>
    %19 = vector.shape_cast %6 : vector<1x32xf32> to vector<1x1x1x32xf32>
    %20 = vector.broadcast %19 : vector<1x1x1x32xf32> to vector<2x2x8x32xf32>
    %21 = arith.mulf %18, %20 : vector<2x2x8x32xf32>
    %cst_16 = arith.constant dense<0.000000e+00> : vector<2x2x8xf32>
    %22 = vector.multi_reduction <add>, %21, %cst_16 [3] : vector<2x2x8x32xf32> to vector<2x2x8xf32>
    %cst_17 = arith.constant dense<0xFF800000> : vector<2x2xf32>
    %23 = vector.multi_reduction <maximumf>, %22, %cst_17 [2] : vector<2x2x8xf32> to vector<2x2xf32>
    %24 = vector.shape_cast %23 : vector<2x2xf32> to vector<2x2x1xf32>
    %25 = vector.broadcast %24 : vector<2x2x1xf32> to vector<2x2x8xf32>
    %26 = arith.subf %22, %25 : vector<2x2x8xf32>
    %27 = math.exp %26 : vector<2x2x8xf32>
    %cst_18 = arith.constant dense<0.000000e+00> : vector<2x2xf32>
    %28 = vector.multi_reduction <add>, %27, %cst_18 [2] : vector<2x2x8xf32> to vector<2x2xf32>
    %29 = vector.shape_cast %28 : vector<2x2xf32> to vector<2x2x1xf32>
    %30 = tpu.reciprocal %29 {approx = true} : vector<2x2x1xf32> -> vector<2x2x1xf32>
    %31 = arith.mulf %29, %30 : vector<2x2x1xf32>
    %cst_19 = arith.constant 2.000000e+00 : f32
    %32 = vector.broadcast %cst_19 : f32 to vector<2x2x1xf32>
    %33 = arith.subf %32, %31 : vector<2x2x1xf32>
    %34 = arith.mulf %30, %33 : vector<2x2x1xf32>
    %35 = vector.broadcast %34 : vector<2x2x1xf32> to vector<2x2x8xf32>
    %36 = arith.mulf %27, %35 : vector<2x2x8xf32>
    %37 = vector.shape_cast %36 : vector<2x2x8xf32> to vector<2x2x8x1xf32>
    %38 = vector.broadcast %37 : vector<2x2x8x1xf32> to vector<2x2x8x32xf32>
    %39 = arith.mulf %38, %1 : vector<2x2x8x32xf32>
    %cst_20 = arith.constant dense<0.000000e+00> : vector<2x2x32xf32>
    %40 = vector.multi_reduction <add>, %39, %cst_20 [2] : vector<2x2x8x32xf32> to vector<2x2x32xf32>
    %41 = vector.extract_strided_slice %40 {offsets = [0, 0, 0], sizes = [1, 2, 32], strides = [1, 1, 1]} : vector<2x2x32xf32> to vector<1x2x32xf32>
    %42 = vector.shape_cast %41 : vector<1x2x32xf32> to vector<2x32xf32>
    %c0_21 = arith.constant 0 : index
    %c0_22 = arith.constant 0 : index
    %43 = vector.load %arg7[%c0_21, %c0_22] : memref<2x64xf32, #tpu.memory_space<vmem>>, vector<2x32xf32>
    tpu.vector_store %arg7[%c0_21, %c0_22], %42 {strides = array<i32>} : memref<2x64xf32, #tpu.memory_space<vmem>>, vector<2x32xf32>,
    %44 = vector.extract_strided_slice %36 {offsets = [0, 0, 0], sizes = [1, 2, 8], strides = [1, 1, 1]} : vector<2x2x8xf32> to vector<1x2x8xf32>
    %45 = vector.shape_cast %44 : vector<1x2x8xf32> to vector<2x8xf32>
    %c0_23 = arith.constant 0 : index
    %c0_24 = arith.constant 0 : index
    %46 = vector.load %arg8[%c0_23, %c0_24] : memref<2x16xf32, #tpu.memory_space<vmem>>, vector<2x8xf32>
    tpu.vector_store %arg8[%c0_23, %c0_24], %45 {strides = array<i32>} : memref<2x16xf32, #tpu.memory_space<vmem>>, vector<2x8xf32>,
    %47 = vector.extract_strided_slice %40 {offsets = [1, 0, 0], sizes = [1, 2, 32], strides = [1, 1, 1]} : vector<2x2x32xf32> to vector<1x2x32xf32>
    %48 = vector.shape_cast %47 : vector<1x2x32xf32> to vector<2x32xf32>
    %c0_25 = arith.constant 0 : index
    %c32 = arith.constant 32 : index
    %49 = vector.load %arg7[%c0_25, %c32] : memref<2x64xf32, #tpu.memory_space<vmem>>, vector<2x32xf32>
    tpu.vector_store %arg7[%c0_25, %c32], %48 {strides = array<i32>} : memref<2x64xf32, #tpu.memory_space<vmem>>, vector<2x32xf32>,
    %50 = vector.extract_strided_slice %36 {offsets = [1, 0, 0], sizes = [1, 2, 8], strides = [1, 1, 1]} : vector<2x2x8xf32> to vector<1x2x8xf32>
    %51 = vector.shape_cast %50 : vector<1x2x8xf32> to vector<2x8xf32>
    %c0_26 = arith.constant 0 : index
    %c8 = arith.constant 8 : index
    %52 = vector.load %arg8[%c0_26, %c8] : memref<2x16xf32, #tpu.memory_space<vmem>>, vector<2x8xf32>
    tpu.vector_store %arg8[%c0_26, %c8], %51 {strides = array<i32>} : memref<2x16xf32, #tpu.memory_space<vmem>>, vector<2x8xf32>,
    return
  }
}

</mosaic_0001>

<llo_original>
// kernel: attentional_attention.1
$region0: #{attentional_attention.1}
  #allocation0 [shape = 'u32[]', space=smem, size = 0x4, offset = 0x4, fixed_abs, tag = 'smem constant byte address 0x4 - core index']
  #allocation1 [shape = 'u32[144,128]{1,0:T(1,128)}', space=vmem, size = 0x12000, scoped, tag = 'internal scratch']
  %s0 = inlined_call_operand.hbm [shape: f32[2,32], index: 0, kind: input, shape index: {}]
  %s1 = inlined_call_operand.hbm [shape: f32[2,2,8,32], index: 1, kind: input, shape index: {}]
  %s2 = inlined_call_operand.hbm [shape: f32[32,32], index: 2, kind: input, shape index: {}]
  %s3 = inlined_call_operand.vmem [shape: f32[1,32], index: 3, kind: input, shape index: {}]
  %s4 = inlined_call_operand.hbm [shape: f32[32,32], index: 4, kind: input, shape index: {}]
  %s5 = inlined_call_operand.vmem [shape: f32[1,32], index: 5, kind: input, shape index: {}]
  %s6 = inlined_call_operand.vmem [shape: f32[1,32], index: 6, kind: input, shape index: {}]
  %s7 = inlined_call_operand.hbm [shape: f32[2,64], index: 7, kind: output, shape index: {0}]
  %s8 = inlined_call_operand.hbm [shape: f32[2,16], index: 8, kind: output, shape index: {1}]
  %9 = xla_tuple %s7, %s8
  %s10 = sld [smem:[#allocation0]]
  $region62: #{attentional_attention.1} parent=0
    _
  %s12 = ssub.s32 1, %s10
  %s13 = scalar_select 0, %s12, %s10
  $region1: #{attentional_attention.1} parent=0
    #allocation2 [shape = 'u8[1024]{0}', space=vmem, size = 0x400, scoped, tag = 'input window, operand 0, single buffered']
    #allocation3 [shape = 's32[1]{0}', space=sflag, size = 0x4, scoped, tag = 'scoped memory for attentional_attention.1']
    #allocation4 [shape = 's32[1]{0}', space=sflag, size = 0x4, scoped, tag = 'scoped memory for attentional_attention.1']
    #allocation5 [shape = 'u8[16384]{0}', space=vmem, size = 0x4000, scoped, tag = 'input window, operand 1, single buffered']
    #allocation6 [shape = 's32[1]{0}', space=sflag, size = 0x4, scoped, tag = 'scoped memory for attentional_attention.1']
    #allocation7 [shape = 'u8[16384]{0}', space=vmem, size = 0x4000, scoped, tag = 'input window, operand 2, single buffered']
    #allocation8 [shape = 'u8[16384]{0}', space=vmem, size = 0x4000, scoped, tag = 'input window, operand 4, single buffered']
    #allocation9 [shape = 's32[1]{0}', space=sflag, size = 0x4, scoped, tag = 'scoped memory for attentional_attention.1']
    #allocation10 [shape = 'u8[1024]{0}', space=vmem, size = 0x400, scoped, tag = 'output window, operand 0, single buffered']
    #allocation11 [shape = 'u8[1024]{0}', space=vmem, size = 0x400, scoped, tag = 'output window, operand 1, single buffered']
    #allocation12 [shape = 's32[1]{0}', space=sflag, size = 0x4, scoped, tag = 'scoped memory for attentional_attention.1']
    %14 = vsyncpa [#allocation3], 0
    %15 = vsyncpa [#allocation6], 0
    %16 = vsyncpa [#allocation9], 0
    %17 = vsyncpa [#allocation4], 0
    %18 = vsyncpa [#allocation12], 0
    // Predicated region
    $region2: #{attentional_attention.1} parent=1 // pred_check
      _
    $region3: #{attentional_attention.1} parent=1 // pred_check_branch
      %20 = sbr.rel (0) target = $region5
    $region4: #{attentional_attention.1} parent=1 // pred_region
      %s22 = ssub.s32 32, 32
      %23 = vsyncadd [#allocation3], %s22
      %s25 = sshll.u32 [#allocation2], 4
      %s26 = int_to_ptr.vmem [resolvable:$true] %s25
      %28 = dma.hbm_to_vmem [thread:$0]  %s0, 32, %s26, [#allocation3]
    $region5: #{attentional_attention.1} parent=1 // pred_fallthru
      _
    // Predicated region
    $region6: #{attentional_attention.1} parent=1 // pred_check
      _
    $region7: #{attentional_attention.1} parent=1 // pred_check_branch
      %30 = sbr.rel (0) target = $region9
    $region8: #{attentional_attention.1} parent=1 // pred_region
      %s32 = ssub.s32 512, 512
      %33 = vsyncadd [#allocation6], %s32
      %s34 = sshll.u32 [#allocation5], 4
      %s35 = int_to_ptr.vmem [resolvable:$true] %s34
      %40 = dma.hbm_to_vmem [thread:$0]  %s1, 512, %s35, [#allocation6], 128, 128, 8
    $region9: #{attentional_attention.1} parent=1 // pred_fallthru
      _
    // Predicated region
    $region10: #{attentional_attention.1} parent=1 // pred_check
      _
    $region11: #{attentional_attention.1} parent=1 // pred_check_branch
      %42 = sbr.rel (0) target = $region13
    $region12: #{attentional_attention.1} parent=1 // pred_region
      %s44 = ssub.s32 512, 512
      %45 = vsyncadd [#allocation6], %s44
      %s46 = sshll.u32 [#allocation7], 4
      %s47 = int_to_ptr.vmem [resolvable:$true] %s46
      %52 = dma.hbm_to_vmem [thread:$0]  %s2, 512, %s47, [#allocation6], 128, 128, 8
    $region13: #{attentional_attention.1} parent=1 // pred_fallthru
      _
    // Predicated region
    $region14: #{attentional_attention.1} parent=1 // pred_check
      _
    $region15: #{attentional_attention.1} parent=1 // pred_check_branch
      %54 = sbr.rel (0) target = $region17
    $region16: #{attentional_attention.1} parent=1 // pred_region
      _
    $region17: #{attentional_attention.1} parent=1 // pred_fallthru
      _
    // Predicated region
    $region18: #{attentional_attention.1} parent=1 // pred_check
      _
    $region19: #{attentional_attention.1} parent=1 // pred_check_branch
      %56 = sbr.rel (0) target = $region21
    $region20: #{attentional_attention.1} parent=1 // pred_region
      %s58 = ssub.s32 512, 512
      %59 = vsyncadd [#allocation9], %s58
      %s60 = sshll.u32 [#allocation8], 4
      %s61 = int_to_ptr.vmem [resolvable:$true] %s60
      %66 = dma.hbm_to_vmem [thread:$0]  %s4, 512, %s61, [#allocation9], 128, 128, 8
    $region21: #{attentional_attention.1} parent=1 // pred_fallthru
      _
    // Predicated region
    $region22: #{attentional_attention.1} parent=1 // pred_check
      _
    $region23: #{attentional_attention.1} parent=1 // pred_check_branch
      %68 = sbr.rel (0) target = $region25
    $region24: #{attentional_attention.1} parent=1 // pred_region
      _
    $region25: #{attentional_attention.1} parent=1 // pred_fallthru
      _
    // Predicated region
    $region26: #{attentional_attention.1} parent=1 // pred_check
      _
    $region27: #{attentional_attention.1} parent=1 // pred_check_branch
      %70 = sbr.rel (0) target = $region29
    $region28: #{attentional_attention.1} parent=1 // pred_region
      _
    $region29: #{attentional_attention.1} parent=1 // pred_fallthru
      _
    // Predicated region
    $region30: #{attentional_attention.1} parent=1 // pred_check
      _
    $region31: #{attentional_attention.1} parent=1 // pred_check_branch
      %72 = sbr.rel (0) target = $region33
    $region32: #{attentional_attention.1} parent=1 // pred_region
      %73 = dma.done [#allocation3], 32
    $region33: #{attentional_attention.1} parent=1 // pred_fallthru
      _
    // Predicated region
    $region34: #{attentional_attention.1} parent=1 // pred_check
      _
    $region35: #{attentional_attention.1} parent=1 // pred_check_branch
      %75 = sbr.rel (0) target = $region37
    $region36: #{attentional_attention.1} parent=1 // pred_region
      %76 = dma.done [#allocation6], 512
    $region37: #{attentional_attention.1} parent=1 // pred_fallthru
      _
    // Predicated region
    $region38: #{attentional_attention.1} parent=1 // pred_check
      _
    $region39: #{attentional_attention.1} parent=1 // pred_check_branch
      %78 = sbr.rel (0) target = $region41
    $region40: #{attentional_attention.1} parent=1 // pred_region
      %79 = dma.done [#allocation6], 512
    $region41: #{attentional_attention.1} parent=1 // pred_fallthru
      _
    // Predicated region
    $region42: #{attentional_attention.1} parent=1 // pred_check
      _
    $region43: #{attentional_attention.1} parent=1 // pred_check_branch
      %81 = sbr.rel (0) target = $region45
    $region44: #{attentional_attention.1} parent=1 // pred_region
      %82 = dma.done [#allocation9], 512
    $region45: #{attentional_attention.1} parent=1 // pred_fallthru
      _
    %v83 = vld [vmem:[#allocation2] sm:$0x3]
    %v84 = vld [vmem:[#allocation5] sm:$0xff]
    %v85 = vld [vmem:[#allocation5 + $0x8] sm:$0xff]
    %v86 = vld [vmem:[#allocation5 + $0x10] sm:$0xff]
    %v87 = vld [vmem:[#allocation5 + $0x18] sm:$0xff]
    %v88 = vld [vmem:[#allocation7] sm:$0xff]
    %v89 = vld [vmem:[#allocation7 + $0x8] sm:$0xff]
    %v90 = vld [vmem:[#allocation7 + $0x10] sm:$0xff]
    %v91 = vld [vmem:[#allocation7 + $0x18] sm:$0xff]
    %v92 = vld [vmem:[%s3] sm:$0x1]
    %v93 = vld [vmem:[#allocation8] sm:$0xff]
    %v94 = vld [vmem:[#allocation8 + $0x8] sm:$0xff]
    %v95 = vld [vmem:[#allocation8 + $0x10] sm:$0xff]
    %v96 = vld [vmem:[#allocation8 + $0x18] sm:$0xff]
    %v97 = vld [vmem:[%s5] sm:$0x1]
    %v98 = vld [vmem:[%s6] sm:$0x1]
    %v100 = vlaneseq
    %v101 = vshrl.u32 %v100, 7
    %v102 = vsub.s32 0, %v101
    %v103 = vrot.slane %v92, %v102
    %vm105 = vcmask 261120
    %v107 = vsel %vm105, %v83, 0
    %109 = vmatprep.subr.mxu0 0.0
    %110 = vmatpush1.msra.mxu0 %v88
    %111 = vmatprep.subr.mxu0 0.0
    %112 = vmatpush1.msra.mxu0 %v89
    %113 = vmatprep.subr.mxu0 0.0
    %114 = vmatpush1.msra.mxu0 %v90
    %115 = vmatprep.subr.mxu0 0.0
    %116 = vmatpush1.msra.mxu0 %v91
    %117 = vmatprep.subr.mxu0 0.0
    %118 = vmatpush1.msra.mxu0 0.0
    %119 = vmatprep.subr.mxu0 0.0
    %120 = vmatpush1.msra.mxu0 0.0
    %121 = vmatprep.subr.mxu0 0.0
    %122 = vmatpush1.msra.mxu0 0.0
    %123 = vmatprep.subr.mxu0 0.0
    %124 = vmatpush1.msra.mxu0 0.0
    %125 = vmatprep.subr.mxu0 0.0
    %126 = vmatpush1.msra.mxu0 0.0
    %127 = vmatprep.subr.mxu0 0.0
    %128 = vmatpush1.msra.mxu0 0.0
    %129 = vmatprep.subr.mxu0 0.0
    %130 = vmatpush1.msra.mxu0 0.0
    %131 = vmatprep.subr.mxu0 0.0
    %132 = vmatpush1.msra.mxu0 0.0
    %133 = vmatprep.subr.mxu0 0.0
    %134 = vmatpush1.msra.mxu0 0.0
    %135 = vmatprep.subr.mxu0 0.0
    %136 = vmatpush1.msra.mxu0 0.0
    %137 = vmatprep.subr.mxu0 0.0
    %138 = vmatpush1.msra.mxu0 0.0
    %139 = vmatprep.subr.mxu0 0.0
    %140 = vmatpush1.msra.mxu0 0.0
    %141 = vmatprep.subr.mxu0 0.0
    %142 = vmatpush1.msra.mxu0 0.0
    %143 = vmatprep.subr.mxu0 0.0
    %144 = vmatpush1.msra.mxu0 0.0
    %145 = vmatprep.subr.mxu0 0.0
    %146 = vmatpush1.msra.mxu0 0.0
    %147 = vmatprep.subr.mxu0 0.0
    %148 = vmatpush1.msra.mxu0 0.0
    %149 = vmatprep.subr.mxu0 0.0
    %150 = vmatpush1.msra.mxu0 0.0
    %151 = vmatprep.subr.mxu0 0.0
    %152 = vmatpush1.msra.mxu0 0.0
    %153 = vmatprep.subr.mxu0 0.0
    %154 = vmatpush1.msra.mxu0 0.0
    %155 = vmatprep.subr.mxu0 0.0
    %156 = vmatpush1.msra.mxu0 0.0
    %157 = vmatprep.subr.mxu0 0.0
    %158 = vmatpush1.msra.mxu0 0.0
    %159 = vmatprep.subr.mxu0 0.0
    %160 = vmatpush1.msra.mxu0 0.0
    %161 = vmatprep.subr.mxu0 0.0
    %162 = vmatpush1.msra.mxu0 0.0
    %163 = vmatprep.subr.mxu0 0.0
    %164 = vmatpush1.msra.mxu0 0.0
    %165 = vmatprep.subr.mxu0 0.0
    %166 = vmatpush1.msra.mxu0 0.0
    %167 = vmatprep.subr.mxu0 0.0
    %168 = vmatpush1.msra.mxu0 0.0
    %169 = vmatprep.subr.mxu0 0.0
    %170 = vmatpush1.msra.mxu0 0.0
    %171 = vmatprep.subr.mxu0 0.0
    %172 = vmatpush1.msra.mxu0 0.0
    %173 = vmatprep.mubr.f32.mxu0 0.0
    %174 = vmatmul.mubr.f32.gmra.mrb[0].mxu0 %v107
    %v175 = vpop.f32.mrb[0].mxu0
    %v176 = vadd.f32 %v103, %v175
    %v177 = vpop.f32.mrb[0].mxu0
    %178 = vdwg.mxu0
    %v180 = vlaneseq
    %v181 = vshrl.u32 %v180, 7
    %v182 = vsub.s32 0, %v181
    %v183 = vrot.slane %v97, %v182
    %v186 = vsel %vm105, %v84, 0
    %v189 = vsel %vm105, %v85, 0
    %v192 = vsel %vm105, %v86, 0
    %v195 = vsel %vm105, %v87, 0
    %197 = vmatprep.subr.mxu0 0.0
    %198 = vmatpush1.msra.mxu0 %v93
    %199 = vmatprep.subr.mxu0 0.0
    %200 = vmatpush1.msra.mxu0 %v94
    %201 = vmatprep.subr.mxu0 0.0
    %202 = vmatpush1.msra.mxu0 %v95
    %203 = vmatprep.subr.mxu0 0.0
    %204 = vmatpush1.msra.mxu0 %v96
    %205 = vmatprep.subr.mxu0 0.0
    %206 = vmatpush1.msra.mxu0 0.0
    %207 = vmatprep.subr.mxu0 0.0
    %208 = vmatpush1.msra.mxu0 0.0
    %209 = vmatprep.subr.mxu0 0.0
    %210 = vmatpush1.msra.mxu0 0.0
    %211 = vmatprep.subr.mxu0 0.0
    %212 = vmatpush1.msra.mxu0 0.0
    %213 = vmatprep.subr.mxu0 0.0
    %214 = vmatpush1.msra.mxu0 0.0
    %215 = vmatprep.subr.mxu0 0.0
    %216 = vmatpush1.msra.mxu0 0.0
    %217 = vmatprep.subr.mxu0 0.0
    %218 = vmatpush1.msra.mxu0 0.0
    %219 = vmatprep.subr.mxu0 0.0
    %220 = vmatpush1.msra.mxu0 0.0
    %221 = vmatprep.subr.mxu0 0.0
    %222 = vmatpush1.msra.mxu0 0.0
    %223 = vmatprep.subr.mxu0 0.0
    %224 = vmatpush1.msra.mxu0 0.0
    %225 = vmatprep.subr.mxu0 0.0
    %226 = vmatpush1.msra.mxu0 0.0
    %227 = vmatprep.subr.mxu0 0.0
    %228 = vmatpush1.msra.mxu0 0.0
    %229 = vmatprep.subr.mxu0 0.0
    %230 = vmatpush1.msra.mxu0 0.0
    %231 = vmatprep.subr.mxu0 0.0
    %232 = vmatpush1.msra.mxu0 0.0
    %233 = vmatprep.subr.mxu0 0.0
    %234 = vmatpush1.msra.mxu0 0.0
    %235 = vmatprep.subr.mxu0 0.0
    %236 = vmatpush1.msra.mxu0 0.0
    %237 = vmatprep.subr.mxu0 0.0
    %238 = vmatpush1.msra.mxu0 0.0
    %239 = vmatprep.subr.mxu0 0.0
    %240 = vmatpush1.msra.mxu0 0.0
    %241 = vmatprep.subr.mxu0 0.0
    %242 = vmatpush1.msra.mxu0 0.0
    %243 = vmatprep.subr.mxu0 0.0
    %244 = vmatpush1.msra.mxu0 0.0
    %245 = vmatprep.subr.mxu0 0.0
    %246 = vmatpush1.msra.mxu0 0.0
    %247 = vmatprep.subr.mxu0 0.0
    %248 = vmatpush1.msra.mxu0 0.0
    %249 = vmatprep.subr.mxu0 0.0
    %250 = vmatpush1.msra.mxu0 0.0
    %251 = vmatprep.subr.mxu0 0.0
    %252 = vmatpush1.msra.mxu0 0.0
    %253 = vmatprep.subr.mxu0 0.0
    %254 = vmatpush1.msra.mxu0 0.0
    %255 = vmatprep.subr.mxu0 0.0
    %256 = vmatpush1.msra.mxu0 0.0
    %257 = vmatprep.subr.mxu0 0.0
    %258 = vmatpush1.msra.mxu0 0.0
    %259 = vmatprep.subr.mxu0 0.0
    %260 = vmatpush1.msra.mxu0 0.0
    %261 = vmatprep.mubr.f32.mxu0 0.0
    %262 = vmatmul.mubr.f32.gmra.mrb[0].mxu0 %v186
    %v263 = vpop.f32.mrb[0].mxu0
    %v264 = vadd.f32 %v183, %v263
    %v265 = vpop.f32.mrb[0].mxu0
    %266 = vmatprep.mubr.f32.mxu0 0.0
    %267 = vmatmul.mubr.f32.gmra.mrb[0].mxu0 %v189
    %v268 = vpop.f32.mrb[0].mxu0
    %v269 = vadd.f32 %v183, %v268
    %v270 = vpop.f32.mrb[0].mxu0
    %271 = vmatprep.mubr.f32.mxu0 0.0
    %272 = vmatmul.mubr.f32.gmra.mrb[0].mxu0 %v192
    %v273 = vpop.f32.mrb[0].mxu0
    %v274 = vadd.f32 %v183, %v273
    %v275 = vpop.f32.mrb[0].mxu0
    %276 = vmatprep.mubr.f32.mxu0 0.0
    %277 = vmatmul.mubr.f32.gmra.mrb[0].mxu0 %v195
    %v278 = vpop.f32.mrb[0].mxu0
    %v279 = vadd.f32 %v183, %v278
    %v280 = vpop.f32.mrb[0].mxu0
    %281 = vdwg.mxu0
    %v284 = vunpack.c.l.s4 1966171168
    %v285 = vunpack.c.0.s8 %v284
    %v286 = vlaneseq
    %v287 = vshrl.u32 %v286, 7
    %v288 = vsub.s32 %v285, %v287
    %v289 = vrot.slane %v176, %v288
    %v290 = vcombine.high %v289, %v289
    %v292 = vunpack.c.l.s4 1966171168
    %v293 = vunpack.c.0.s8 %v292
    %v294 = vlaneseq
    %v295 = vshrl.u32 %v294, 7
    %v296 = vsub.s32 %v293, %v295
    %v297 = vrot.slane %v289, %v296
    %v299 = vunpack.c.l.s4 1966171168
    %v300 = vunpack.c.0.s8 %v299
    %v301 = vlaneseq
    %v302 = vshrl.u32 %v301, 7
    %v303 = vsub.s32 %v300, %v302
    %v304 = vrot.slane %v290, %v303
    %v305 = vlaneseq
    %v306 = vshrl.u32 %v305, 7
    %v307 = vsub.s32 0, %v306
    %v308 = vrot.slane %v297, %v307
    %v309 = vlaneseq
    %v310 = vshrl.u32 %v309, 7
    %v311 = vsub.s32 0, %v310
    %v312 = vrot.slane %v304, %v311
    %v315 = vadd.f32 %v308, %v264
    %v316 = vadd.f32 %v312, %v269
    %v317 = vadd.f32 %v308, %v274
    %v318 = vadd.f32 %v312, %v279
    %v319 = vtanh.pop %v315
    %v320 = vtanh.pop %v316
    %v321 = vtanh.pop %v317
    %v322 = vtanh.pop %v318
    %v324 = vlaneseq
    %v325 = vshrl.u32 %v324, 7
    %v326 = vsub.s32 0, %v325
    %v327 = vrot.slane %v98, %v326
    %v329 = vmul.f32 %v319, %v327
    %v330 = vmul.f32 %v320, %v327
    %v331 = vmul.f32 %v321, %v327
    %v332 = vmul.f32 %v322, %v327
    %v333 = vsel %vm105, %v329, 0.0
    %334 = vadd.xlane.f32.xlu0 %v333
    %v335 = vpop.xlane.xlu0 %334
    %v336 = vsel %vm105, %v330, 0.0
    %337 = vadd.xlane.f32.xlu0 %v336
    %v338 = vpop.xlane.xlu0 %337
    %v339 = vsel %vm105, %v331, 0.0
    %340 = vadd.xlane.f32.xlu0 %v339
    %v341 = vpop.xlane.xlu0 %340
    %v342 = vsel %vm105, %v332, 0.0
    %343 = vadd.xlane.f32.xlu0 %v342
    %v344 = vpop.xlane.xlu0 %343
    %v349 = vlaneseq
    %v350 = vand.u32 %v349, 127
    %v351 = vlaneseq
    %v352 = vshrl.u32 %v351, 7
    %v353 = vsub.s32 %v350, %v352
    %v354 = vrot.slane %v335, %v353
    %v355 = vlaneseq
    %v356 = vshrl.u32 %v355, 7
    %v357 = vsub.s32 %v350, %v356
    %v358 = vrot.slane %v338, %v357
    %v359 = vlaneseq
    %v360 = vshrl.u32 %v359, 7
    %v361 = vsub.s32 %v350, %v360
    %v362 = vrot.slane %v341, %v361
    %v363 = vlaneseq
    %v364 = vshrl.u32 %v363, 7
    %v365 = vsub.s32 %v350, %v364
    %v366 = vrot.slane %v344, %v365
    %vm367 = vcmask 1041409
    %v368 = vsel %vm367, %v358, %v354
    %v369 = vsel %vm367, %v366, %v362
    %vm372 = vcmask 58368
    %v373 = vsel %vm372, %v368, -inf
    %374 = vmax.xlane.f32.xlu0 %v373
    %v375 = vpop.xlane.xlu0 %374
    %v376 = vsel %vm372, %v369, -inf
    %377 = vmax.xlane.f32.xlu0 %v376
    %v378 = vpop.xlane.xlu0 %377
    %v381 = vlaneseq
    %v382 = vshrl.u32 %v381, 7
    %v383 = vsub.s32 0, %v382
    %v384 = vrot.slane %v375, %v383
    %v385 = vlaneseq
    %v386 = vshrl.u32 %v385, 7
    %v387 = vsub.s32 1, %v386
    %v388 = vrot.slane %v375, %v387
    %v389 = vlaneseq
    %v390 = vshrl.u32 %v389, 7
    %v391 = vsub.s32 0, %v390
    %v392 = vrot.slane %v378, %v391
    %v393 = vlaneseq
    %v394 = vshrl.u32 %v393, 7
    %v395 = vsub.s32 1, %v394
    %v396 = vrot.slane %v378, %v395
    %v401 = vsub.f32 %v335, %v384
    %v402 = vsub.f32 %v338, %v388
    %v403 = vsub.f32 %v341, %v392
    %v404 = vsub.f32 %v344, %v396
    %v405 = vmul.f32 %v401, 1.442695
    %v406 = vpow.pop %v405
    %v407 = vmul.f32 %v402, 1.442695
    %v408 = vpow.pop %v407
    %v409 = vmul.f32 %v403, 1.442695
    %v410 = vpow.pop %v409
    %v411 = vmul.f32 %v404, 1.442695
    %v412 = vpow.pop %v411
    %417 = vset.pattern.permute.xlu0 0
    %418 = vperm.xlu0 %417, %v406
    %v419 = vpop.permute.xlu0 %418
    %420 = vset.pattern.permute.xlu0 0
    %421 = vperm.xlu0 %420, %v408
    %v422 = vpop.permute.xlu0 %421
    %423 = vset.pattern.permute.xlu0 0
    %424 = vperm.xlu0 %423, %v410
    %v425 = vpop.permute.xlu0 %424
    %426 = vset.pattern.permute.xlu0 0
    %427 = vperm.xlu0 %426, %v412
    %v428 = vpop.permute.xlu0 %427
    %v429 = vlaneseq
    %v430 = vshrl.u32 %v429, 7
    %v431 = vsub.s32 %v350, %v430
    %v432 = vrot.slane %v419, %v431
    %v433 = vlaneseq
    %v434 = vshrl.u32 %v433, 7
    %v435 = vsub.s32 %v350, %v434
    %v436 = vrot.slane %v422, %v435
    %v437 = vlaneseq
    %v438 = vshrl.u32 %v437, 7
    %v439 = vsub.s32 %v350, %v438
    %v440 = vrot.slane %v425, %v439
    %v441 = vlaneseq
    %v442 = vshrl.u32 %v441, 7
    %v443 = vsub.s32 %v350, %v442
    %v444 = vrot.slane %v428, %v443
    %v445 = vsel %vm367, %v436, %v432
    %v446 = vsel %vm367, %v444, %v440
    %v449 = vsel %vm372, %v445, 0.0
    %450 = vadd.xlane.f32.xlu0 %v449
    %v451 = vpop.xlane.xlu0 %450
    %v452 = vsel %vm372, %v446, 0.0
    %453 = vadd.xlane.f32.xlu0 %v452
    %v454 = vpop.xlane.xlu0 %453
    %v455 = vrcp.pop %v451
    %v456 = vrcp.pop %v454
    %v457 = vmul.f32 %v451, %v455
    %v458 = vmul.f32 %v454, %v456
    %v459 = vsub.f32 2.0, %v457
    %v460 = vsub.f32 2.0, %v458
    %v461 = vmul.f32 %v455, %v459
    %v462 = vmul.f32 %v456, %v460
    %v465 = vlaneseq
    %v466 = vshrl.u32 %v465, 7
    %v467 = vsub.s32 0, %v466
    %v468 = vrot.slane %v461, %v467
    %v469 = vlaneseq
    %v470 = vshrl.u32 %v469, 7
    %v471 = vsub.s32 1, %v470
    %v472 = vrot.slane %v461, %v471
    %v473 = vlaneseq
    %v474 = vshrl.u32 %v473, 7
    %v475 = vsub.s32 0, %v474
    %v476 = vrot.slane %v462, %v475
    %v477 = vlaneseq
    %v478 = vshrl.u32 %v477, 7
    %v479 = vsub.s32 1, %v478
    %v480 = vrot.slane %v462, %v479
    %v485 = vmul.f32 %v406, %v468
    %v486 = vmul.f32 %v408, %v472
    %v487 = vmul.f32 %v410, %v476
    %v488 = vmul.f32 %v412, %v480
    %490 = vset.pattern.permute.xlu0 0
    %491 = vperm.xlu0 %490, %v485
    %v492 = vpop.permute.xlu0 %491
    %495 = vset.pattern.permute.xlu0 0
    %496 = vperm.xlu0 %495, %v486
    %v497 = vpop.permute.xlu0 %496
    %500 = vset.pattern.permute.xlu0 0
    %501 = vperm.xlu0 %500, %v487
    %v502 = vpop.permute.xlu0 %501
    %505 = vset.pattern.permute.xlu0 0
    %506 = vperm.xlu0 %505, %v488
    %v507 = vpop.permute.xlu0 %506
    %v509 = vmul.f32 %v492, %v84
    %v510 = vmul.f32 %v497, %v85
    %v511 = vmul.f32 %v502, %v86
    %v512 = vmul.f32 %v507, %v87
    %v513 = vsel %vm105, %v509, 0.0
    %v514 = vrot.slane %v513, 4
    %v515 = vadd.f32 %v513, %v514
    %v516 = vrot.slane %v515, 2
    %v517 = vadd.f32 %v515, %v516
    %v518 = vrot.slane %v517, 1
    %v519 = vadd.f32 %v517, %v518
    %v520 = vsel %vm105, %v510, 0.0
    %v521 = vrot.slane %v520, 4
    %v522 = vadd.f32 %v520, %v521
    %v523 = vrot.slane %v522, 2
    %v524 = vadd.f32 %v522, %v523
    %v525 = vrot.slane %v524, 1
    %v526 = vadd.f32 %v524, %v525
    %v527 = vsel %vm105, %v511, 0.0
    %v528 = vrot.slane %v527, 4
    %v529 = vadd.f32 %v527, %v528
    %v530 = vrot.slane %v529, 2
    %v531 = vadd.f32 %v529, %v530
    %v532 = vrot.slane %v531, 1
    %v533 = vadd.f32 %v531, %v532
    %v534 = vsel %vm105, %v512, 0.0
    %v535 = vrot.slane %v534, 4
    %v536 = vadd.f32 %v534, %v535
    %v537 = vrot.slane %v536, 2
    %v538 = vadd.f32 %v536, %v537
    %v539 = vrot.slane %v538, 1
    %v540 = vadd.f32 %v538, %v539
    %v543 = vsel %vm367, %v526, %v519
    %vm545 = vcmask 254976
    %546 = vst.msk [vmem:[#allocation10] sm:$0x3] %vm545, %v543
    %v547 = vlaneseq
    %v548 = vshrl.u32 %v547, 7
    %v549 = vsub.s32 %v350, %v548
    %v550 = vrot.slane %v492, %v549
    %v551 = vlaneseq
    %v552 = vshrl.u32 %v551, 7
    %v553 = vsub.s32 %v350, %v552
    %v554 = vrot.slane %v497, %v553
    %v555 = vsel %vm367, %v554, %v550
    %557 = vst.msk [vmem:[#allocation11] sm:$0x3] %vm372, %v555
    %v560 = vsel %vm367, %v540, %v533
    %561 = vrot.lane.b32.xlu0 %v560, 32
    %v562 = vpop.permute.xlu0 %561
    %vm564 = vcmask 517376
    %565 = vst.msk [vmem:[#allocation10] sm:$0x3] %vm564, %v562
    %v566 = vadd.s32 %v350, 4294967288
    %v567 = vlaneseq
    %v568 = vshrl.u32 %v567, 7
    %v569 = vsub.s32 %v566, %v568
    %v570 = vrot.slane %v502, %v569
    %v571 = vlaneseq
    %v572 = vshrl.u32 %v571, 7
    %v573 = vsub.s32 %v566, %v572
    %v574 = vrot.slane %v507, %v573
    %v575 = vsel %vm367, %v574, %v570
    %vm577 = vcmask 123968
    %578 = vst.msk [vmem:[#allocation11] sm:$0x3] %vm577, %v575
    // Predicated region
    $region46: #{attentional_attention.1} parent=1 // pred_check
      _
    $region47: #{attentional_attention.1} parent=1 // pred_check_branch
      %580 = sbr.rel (0) target = $region49
    $region48: #{attentional_attention.1} parent=1 // pred_region
      %s582 = ssub.s32 32, 32
      %583 = vsyncadd [#allocation4], %s582
      %s585 = sshll.u32 [#allocation10], 4
      %s586 = int_to_ptr.vmem [resolvable:$true] %s585
      %588 = dma.vmem_to_hbm [thread:$0]  %s586, 32, %s7, [#allocation4]
    $region49: #{attentional_attention.1} parent=1 // pred_fallthru
      _
    // Predicated region
    $region50: #{attentional_attention.1} parent=1 // pred_check
      _
    $region51: #{attentional_attention.1} parent=1 // pred_check_branch
      %590 = sbr.rel (0) target = $region53
    $region52: #{attentional_attention.1} parent=1 // pred_region
      %s592 = ssub.s32 32, 32
      %593 = vsyncadd [#allocation12], %s592
      %s595 = sshll.u32 [#allocation11], 4
      %s596 = int_to_ptr.vmem [resolvable:$true] %s595
      %598 = dma.vmem_to_hbm [thread:$0]  %s596, 32, %s8, [#allocation12]
    $region53: #{attentional_attention.1} parent=1 // pred_fallthru
      _
    // Predicated region
    $region54: #{attentional_attention.1} parent=1 // pred_check
      _
    $region55: #{attentional_attention.1} parent=1 // pred_check_branch
      %600 = sbr.rel (0) target = $region57
    $region56: #{attentional_attention.1} parent=1 // pred_region
      %601 = dma.done [#allocation4], 32
    $region57: #{attentional_attention.1} parent=1 // pred_fallthru
      _
    // Predicated region
    $region58: #{attentional_attention.1} parent=1 // pred_check
      _
    $region59: #{attentional_attention.1} parent=1 // pred_check_branch
      %603 = sbr.rel (0) target = $region61
    $region60: #{attentional_attention.1} parent=1 // pred_region
      %604 = dma.done [#allocation12], 32
    $region61: #{attentional_attention.1} parent=1 // pred_fallthru
      _
    %605 = vsyncpa [#allocation3], 1
    %606 = vsyncpa [#allocation6], 1
    %607 = vsyncpa [#allocation9], 1
    %608 = vsyncpa [#allocation4], 1
    %609 = vsyncpa [#allocation12], 1

</llo_original>
